<compile_context>
chip_gen: v5e
topology: v5e:2x2
jax: 0.10.0
libtpu: 0.0.40
codegen_flags: <defaults>
</compile_context>

<pallas_src>
import jax
import jax.numpy as jnp
from jax.experimental import pallas as pl
from jax.experimental.pallas import tpu as pltpu


def _calibrator_kernel(x_ref, w_ref, b_ref, o_ref):
    # logits = x @ W + b   (MXU matmul, f32 accumulation)
    logits = jnp.dot(
        x_ref[...], w_ref[...], preferred_element_type=jnp.float32
    ) + b_ref[...]
    # log_softmax along the class axis (dim=1), numerically stable, all in f32.
    m = jnp.max(logits, axis=1, keepdims=True)
    z = logits - m
    lse = jnp.log(jnp.sum(jnp.exp(z), axis=1, keepdims=True))
    o_ref[...] = (z - lse).astype(o_ref.dtype)


def _round_up(x: int, m: int) -> int:
    return ((x + m - 1) // m) * m


def base_calibrator_calibrate(features, weight, bias, *, tile_n: int = 8192):
    """features: (N, F) f32, weight: (F, C) f32, bias: (C,) f32 -> (N, C) f32 log-posteriors.

    Tiles the sample axis with TILE_N-row blocks (double-buffered by BlockSpec);
    weight/bias stay resident in VMEM across all grid steps.
    """
    n, f = features.shape
    c = weight.shape[1]
    bias2d = bias.reshape(1, c)

    # Row tile: large for bandwidth (default 8K rows), but never bigger than the
    # (sublane-padded) input, and always a multiple of 8.
    tile_n = max(8, min(tile_n, _round_up(n, 8)))
    tile_n = _round_up(tile_n, 8)

    # Pad N up to a multiple of tile_n; padded rows are computed (harmless finite
    # values) and sliced off below, so they never clobber real data.
    n_pad = _round_up(n, tile_n)
    if n_pad != n:
        features = jnp.pad(features, ((0, n_pad - n), (0, 0)))

    grid = (n_pad // tile_n,)

    out = pl.pallas_call(
        _calibrator_kernel,
        out_shape=jax.ShapeDtypeStruct((n_pad, c), jnp.float32),
        grid=grid,
        in_specs=[
            pl.BlockSpec((tile_n, f), lambda i: (i, 0)),   # features: streamed per tile
            pl.BlockSpec((f, c), lambda i: (0, 0)),        # weight: VMEM-resident
            pl.BlockSpec((1, c), lambda i: (0, 0)),        # bias:   VMEM-resident
        ],
        out_specs=pl.BlockSpec((tile_n, c), lambda i: (i, 0)),
        compiler_params=pltpu.CompilerParams(
            dimension_semantics=("parallel",),              # row tiles are independent
        ),
    )(features, weight, bias2d)

    return out[:n]


if __name__ == "__main__":
    # Small shapes consistent with the module's contract:
    #   num_samples=8, num_features=32, num_classes=4
    num_samples, num_features, num_classes = 8, 32, 4

    key = jax.random.PRNGKey(0)
    k_x, k_w, k_b = jax.random.split(key, 3)
    features = jax.random.normal(k_x, (num_samples, num_features), dtype=jnp.float32)
    # Deterministic parameter init (synthetic; no checkpoint load).
    weight = 0.05 * jax.random.normal(k_w, (num_features, num_classes), dtype=jnp.float32)
    bias = 0.01 * jax.random.normal(k_b, (num_classes,), dtype=jnp.float32)

    # Reference in plain JAX (same semantics as torch.log_softmax(x @ W + b, dim=1)).
    def ref_fn(x):
        return jax.nn.log_softmax(x @ weight + bias[None, :], axis=1)

    # 1) Single-tile path.
    out = base_calibrator_calibrate(features, weight, bias)
    out = jax.block_until_ready(out)
    assert out.shape == (num_samples, num_classes)
    assert jnp.allclose(out, ref_fn(features), atol=1e-5, rtol=1e-5)

    # 2) Multi-tile path with a ragged tail (N=20 not a multiple of tile_n=8),
    #    exercising the padding + slice-off logic and the tiled grid.
    n2 = 20
    features2 = jax.random.normal(jax.random.PRNGKey(1), (n2, num_features), dtype=jnp.float32)
    out2 = base_calibrator_calibrate(features2, weight, bias, tile_n=8)
    out2 = jax.block_until_ready(out2)
    assert out2.shape == (n2, num_classes)
    assert jnp.allclose(out2, ref_fn(features2), atol=1e-5, rtol=1e-5)

    print("KERNEL_OK")
</pallas_src>

<mosaic_0001>
module attributes {stable_mosaic.version = 11 : i64} {
  func.func @_calibrator_kernel(%arg0: i32, %arg1: memref<8x32xf32, #tpu.memory_space<vmem>>, %arg2: memref<32x4xf32, #tpu.memory_space<vmem>>, %arg3: memref<1x4xf32, #tpu.memory_space<vmem>>, %arg4: memref<8x4xf32, #tpu.memory_space<vmem>>) attributes {dimension_semantics = [#tpu.dimension_semantics<parallel>], iteration_bounds = array<i64: 1>, scalar_prefetch = 0 : i64, scratch_operands = 0 : i64, tpu.core_type = #tpu.core_type<tc>, window_params = [{transform_indices = @transform_0, window_bounds = array<i64: 8, 32>}, {pipeline_mode = #tpu.pipeline_mode<synchronous>, transform_indices = @transform_1, window_bounds = array<i64: 32, 4>}, {pipeline_mode = #tpu.pipeline_mode<synchronous>, transform_indices = @transform_2, window_bounds = array<i64: 1, 4>}, {transform_indices = @transform_3, window_bounds = array<i64: 8, 4>}]} {
    %c0 = arith.constant 0 : index
    %c0_0 = arith.constant 0 : index
    %0 = vector.load %arg1[%c0, %c0_0] : memref<8x32xf32, #tpu.memory_space<vmem>>, vector<8x32xf32>
    %c0_1 = arith.constant 0 : index
    %c0_2 = arith.constant 0 : index
    %1 = vector.load %arg2[%c0_1, %c0_2] : memref<32x4xf32, #tpu.memory_space<vmem>>, vector<32x4xf32>
    %cst = arith.constant dense<0.000000e+00> : vector<8x4xf32>
    %2 = tpu.matmul %0, %1, %cst {dimension_numbers = #tpu.dot_dimension_numbers<[1], [0], [0], [1], [0, 0, 1, 1], [], []>} : vector<8x32xf32>, vector<32x4xf32>, vector<8x4xf32> -> vector<8x4xf32>
    %c0_3 = arith.constant 0 : index
    %c0_4 = arith.constant 0 : index
    %3 = vector.load %arg3[%c0_3, %c0_4] : memref<1x4xf32, #tpu.memory_space<vmem>>, vector<1x4xf32>
    %4 = vector.broadcast %3 : vector<1x4xf32> to vector<8x4xf32>
    %5 = arith.addf %2, %4 : vector<8x4xf32>
    %cst_5 = arith.constant dense<0xFF800000> : vector<8xf32>
    %6 = vector.multi_reduction <maximumf>, %5, %cst_5 [1] : vector<8x4xf32> to vector<8xf32>
    %7 = vector.shape_cast %6 : vector<8xf32> to vector<8x1xf32>
    %8 = vector.broadcast %7 : vector<8x1xf32> to vector<8x4xf32>
    %9 = arith.subf %5, %8 : vector<8x4xf32>
    %10 = math.exp %9 : vector<8x4xf32>
    %cst_6 = arith.constant dense<0.000000e+00> : vector<8xf32>
    %11 = vector.multi_reduction <add>, %10, %cst_6 [1] : vector<8x4xf32> to vector<8xf32>
    %12 = vector.shape_cast %11 : vector<8xf32> to vector<8x1xf32>
    %13 = math.log %12 : vector<8x1xf32>
    %14 = vector.broadcast %13 : vector<8x1xf32> to vector<8x4xf32>
    %15 = arith.subf %9, %14 : vector<8x4xf32>
    %c0_7 = arith.constant 0 : index
    %c0_8 = arith.constant 0 : index
    %16 = vector.load %arg4[%c0_7, %c0_8] : memref<8x4xf32, #tpu.memory_space<vmem>>, vector<8x4xf32>
    tpu.vector_store %arg4[%c0_7, %c0_8], %15 {strides = array<i32>} : memref<8x4xf32, #tpu.memory_space<vmem>>, vector<8x4xf32>,
    return
  }
  func.func @transform_0(%arg0: i32) -> (i32, i32) {
    %c0_i32 = arith.constant 0 : i32
    %c0_i32_0 = arith.constant 0 : i32
    return %arg0, %c0_i32 : i32, i32
  }
  func.func @transform_1(%arg0: i32) -> (i32, i32) {
    %c0_i32 = arith.constant 0 : i32
    %c0_i32_0 = arith.constant 0 : i32
    %c0_i32_1 = arith.constant 0 : i32
    return %c0_i32, %c0_i32_0 : i32, i32
  }
  func.func @transform_2(%arg0: i32) -> (i32, i32) {
    %c0_i32 = arith.constant 0 : i32
    %c0_i32_0 = arith.constant 0 : i32
    %c0_i32_1 = arith.constant 0 : i32
    return %c0_i32, %c0_i32_0 : i32, i32
  }
  func.func @transform_3(%arg0: i32) -> (i32, i32) {
    %c0_i32 = arith.constant 0 : i32
    %c0_i32_0 = arith.constant 0 : i32
    return %arg0, %c0_i32 : i32, i32
  }
}

</mosaic_0001>

<llo_original>
// kernel: tpu_custom_call.1
$region0: #{tpu_custom_call.1}
  #allocation0 [shape = 'u32[]', space=smem, size = 0x4, offset = 0x4, fixed_abs, tag = 'smem constant byte address 0x4 - core index']
  #allocation1 [shape = 'u32[72,128]{1,0:T(1,128)}', space=vmem, size = 0x9000, scoped, tag = 'internal scratch']
  %s0 = inlined_call_operand.vmem [shape: f32[8,32], index: 0, kind: input, shape index: {}]
  %s1 = inlined_call_operand.vmem [shape: f32[32,4], index: 1, kind: input, shape index: {}]
  %s2 = inlined_call_operand.vmem [shape: f32[1,4], index: 2, kind: input, shape index: {}]
  %s3 = inlined_call_operand.vmem [shape: f32[8,4], index: 3, kind: output, shape index: {}]
  %s4 = sld [smem:[#allocation0]]
  $region22: #{tpu_custom_call.1} parent=0
    _
  %s6 = ssub.s32 1, %s4
  %s7 = scalar_select 0, %s6, %s4
  // Predicated region
  $region2: #{tpu_custom_call.1} parent=0 // pred_check
    _
  $region3: #{tpu_custom_call.1} parent=0 // pred_check_branch
    %9 = sbr.rel (0) target = $region5
  $region4: #{tpu_custom_call.1} parent=0 // pred_region
    _
  $region5: #{tpu_custom_call.1} parent=0 // pred_fallthru
    _
  // Predicated region
  $region6: #{tpu_custom_call.1} parent=0 // pred_check
    _
  $region7: #{tpu_custom_call.1} parent=0 // pred_check_branch
    %11 = sbr.rel (0) target = $region9
  $region8: #{tpu_custom_call.1} parent=0 // pred_region
    _
  $region9: #{tpu_custom_call.1} parent=0 // pred_fallthru
    _
  // Predicated region
  $region10: #{tpu_custom_call.1} parent=0 // pred_check
    _
  $region11: #{tpu_custom_call.1} parent=0 // pred_check_branch
    %13 = sbr.rel (0) target = $region13
  $region12: #{tpu_custom_call.1} parent=0 // pred_region
    _
  $region13: #{tpu_custom_call.1} parent=0 // pred_fallthru
    _
  %v14 = vld [vmem:[%s0] sm:$0xff]
  %v15 = vld [vmem:[%s1] sm:$0xff]
  %v16 = vld [vmem:[%s1 + $0x8] sm:$0xff]
  %v17 = vld [vmem:[%s1 + $0x10] sm:$0xff]
  %v18 = vld [vmem:[%s1 + $0x18] sm:$0xff]
  %v19 = vld [vmem:[%s2] sm:$0x1]
  %v21 = vperm.slane %v19, 0
  %vm23 = vcmask 261120
  %v25 = vsel %vm23, %v14, 0
  %27 = vmatpush.msra.mxu0 0.0
  %28 = vmatpush.msra.mxu0 0.0
  %29 = vmatpush.msra.mxu0 0.0
  %30 = vmatpush.msra.mxu0 0.0
  %31 = vmatpush.msra.mxu0 0.0
  %32 = vmatpush.msra.mxu0 0.0
  %33 = vmatpush.msra.mxu0 0.0
  %34 = vmatpush.msra.mxu0 0.0
  %35 = vmatpush.msra.mxu0 0.0
  %36 = vmatpush.msra.mxu0 0.0
  %37 = vmatpush.msra.mxu0 0.0
  %38 = vmatpush.msra.mxu0 0.0
  %39 = vmatpush.msra.mxu0 %v18
  %40 = vmatpush.msra.mxu0 %v17
  %41 = vmatpush.msra.mxu0 %v16
  %42 = vmatpush.msra.mxu0 %v15
  %43 = vmatmul.f32.gmra.mxu0 %v25
  %v44 = vpop.f32.mrf.mxu0
  %v45 = vadd.f32 %v21, %v44
  %46 = vdwg.mxu0
  %vm47 = vcmask 31744
  %v48 = vsel %vm47, %v45, -inf
  %49 = vmax.xlane.f32.xlu0 %v48
  %v50 = vpop.xlane.xlu0 %49
  %v51 = vsub.f32 %v45, %v50
  %v52 = vmul.f32 %v51, 1.442695
  %v53 = vpow.pop %v52
  %v54 = vsel %vm47, %v53, 0.0
  %55 = vadd.xlane.f32.xlu0 %v54
  %v56 = vpop.xlane.xlu0 %55
  %v57 = vlog2.pop %v56
  %v58 = vmul.f32 %v57, 0.6931472
  %v59 = vsub.f32 %v51, %v58
  %60 = vst.msk [vmem:[%s3] sm:$0xff] %vm47, %v59
  // Predicated region
  $region14: #{tpu_custom_call.1} parent=0 // pred_check
    _
  $region15: #{tpu_custom_call.1} parent=0 // pred_check_branch
    %62 = sbr.rel (0) target = $region17
  $region16: #{tpu_custom_call.1} parent=0 // pred_region
    _
  $region17: #{tpu_custom_call.1} parent=0 // pred_fallthru
    _
  // Predicated region
  $region18: #{tpu_custom_call.1} parent=0 // pred_check
    _
  $region19: #{tpu_custom_call.1} parent=0 // pred_check_branch
    %64 = sbr.rel (0) target = $region21
  $region20: #{tpu_custom_call.1} parent=0 // pred_region
    _
  $region21: #{tpu_custom_call.1} parent=0 // pred_fallthru
    _

</llo_original>
